<compile_context>
chip_gen: v7x
topology: tpu7x:2x2x1
jax: 0.10.0
libtpu: 0.0.40
codegen_flags: <defaults>
</compile_context>

<pallas_src>
import jax
import jax.numpy as jnp
from jax.experimental import pallas as pl
from jax.experimental.pallas import tpu as pltpu

BN_EPS = 1e-5


# ----------------------------------------------------------------------------
# Kernel
# ----------------------------------------------------------------------------
def _mlp_kernel(x1_ref, x2_ref,
                w1a_ref, w1b_ref, b1_ref,
                w2_ref, b2_ref,
                w3_ref, b3_ref,
                o_ref):
    # --- layer 1: split Linear(2E, H1) + ReLU  (BN1 is folded into W2/b2) ---
    h = jnp.dot(x1_ref[...], w1a_ref[...], preferred_element_type=jnp.float32)
    h = h + jnp.dot(x2_ref[...], w1b_ref[...], preferred_element_type=jnp.float32)
    h = jnp.maximum(h + b1_ref[...], 0.0)

    # --- layer 2: Linear(H1, H2) [BN1 pre-folded] + ReLU (BN2 folded ahead) ---
    h = jnp.dot(h.astype(jnp.bfloat16), w2_ref[...],
                preferred_element_type=jnp.float32) + b2_ref[...]
    h = jnp.maximum(h, 0.0)

    # --- head: Linear(H2, 1) [BN2 pre-folded] as VPU mul + row reduce ---
    logit = jnp.sum(h * w3_ref[...], axis=-1, keepdims=True) + b3_ref[...]
    o_ref[...] = jax.nn.sigmoid(logit)


# ----------------------------------------------------------------------------
# Wrapper
# ----------------------------------------------------------------------------
def _rep_spec(shape):
    """Block covering the full array, replicated across the batch grid axis."""
    nd = len(shape)
    return pl.BlockSpec(shape, lambda i, _nd=nd: (0,) * _nd)


@jax.jit
def playlist_recommender_forward(x1, x2, kparams):
    """x1, x2: (B, E) float32 embeddings. Returns (B, 1) float32 in [0, 1]."""
    B, E = x1.shape
    x1 = x1.astype(jnp.bfloat16)
    x2 = x2.astype(jnp.bfloat16)

    # Row-tile the batch. Weights stay VMEM-resident (constant index_map);
    # only activations stream per tile, so this pipelines cleanly at large B
    # and keeps per-tile VMEM bounded (safe for v7x's 64 MiB VMEM).
    TM_MAX = 256
    if B <= TM_MAX:
        tm = ((B + 7) // 8) * 8          # single full-batch tile, 8-aligned
    else:
        tm = TM_MAX
    b_pad = ((B + tm - 1) // tm) * tm
    if b_pad != B:
        x1 = jnp.pad(x1, ((0, b_pad - B), (0, 0)))
        x2 = jnp.pad(x2, ((0, b_pad - B), (0, 0)))

    args = (
        x1, x2,
        kparams["w1a"], kparams["w1b"], kparams["b1"],
        kparams["w2"], kparams["b2"],
        kparams["w3"], kparams["b3"],
    )
    row_spec = pl.BlockSpec((tm, E), lambda i: (i, 0))
    in_specs = [row_spec, row_spec] + [_rep_spec(a.shape) for a in args[2:]]

    out = pl.pallas_call(
        _mlp_kernel,
        out_shape=jax.ShapeDtypeStruct((b_pad, 1), jnp.float32),
        grid=(b_pad // tm,),
        in_specs=in_specs,
        out_specs=pl.BlockSpec((tm, 1), lambda i: (i, 0)),
        compiler_params=pltpu.CompilerParams(
            dimension_semantics=("parallel",),   # megacore sharding on v7x
        ),
    )(*args)
    return out[:B]


# ----------------------------------------------------------------------------
# Parameter construction (PyTorch-style) and BN-folding prep
# ----------------------------------------------------------------------------
def init_params(key, embedding_dim, hidden_dims=(512, 256)):
    """Deterministic init mirroring PyTorch defaults (uniform +-1/sqrt(fan_in))."""
    dims = [embedding_dim * 2] + list(hidden_dims)
    keys = jax.random.split(key, 3)
    params = {}

    def linear(k, fan_in, fan_out):
        k_w, k_b = jax.random.split(k)
        bound = 1.0 / jnp.sqrt(fan_in)
        w = jax.random.uniform(k_w, (fan_in, fan_out), jnp.float32, -bound, bound)
        b = jax.random.uniform(k_b, (1, fan_out), jnp.float32, -bound, bound)
        return w, b

    params["w1"], params["b1"] = linear(keys[0], dims[0], dims[1])
    params["g1"] = jnp.ones((1, dims[1]), jnp.float32)
    params["be1"] = jnp.zeros((1, dims[1]), jnp.float32)
    params["m1"] = jnp.zeros((1, dims[1]), jnp.float32)   # running_mean
    params["v1"] = jnp.ones((1, dims[1]), jnp.float32)    # running_var

    params["w2"], params["b2"] = linear(keys[1], dims[1], dims[2])
    params["g2"] = jnp.ones((1, dims[2]), jnp.float32)
    params["be2"] = jnp.zeros((1, dims[2]), jnp.float32)
    params["m2"] = jnp.zeros((1, dims[2]), jnp.float32)
    params["v2"] = jnp.ones((1, dims[2]), jnp.float32)

    params["w3"], params["b3"] = linear(keys[2], dims[2], 1)
    return params


def fold_params(p):
    """Fold eval-mode BN affines into the *following* Linear layers and cast the
    large weights to bf16. Done once at load time, not per call.

    BN(y) = a*y + c with a = g*rsqrt(v+eps), c = be - m*a; since BN sits after
    ReLU and before the next Linear:  BN(h) @ W + b = h @ (a[:,None]*W) + (c@W + b).
    """
    E = p["w1"].shape[0] // 2
    a1 = p["g1"] * jax.lax.rsqrt(p["v1"] + BN_EPS)   # (1, H1)
    c1 = p["be1"] - p["m1"] * a1                      # (1, H1)
    a2 = p["g2"] * jax.lax.rsqrt(p["v2"] + BN_EPS)   # (1, H2)
    c2 = p["be2"] - p["m2"] * a2                      # (1, H2)

    w2f = a1.reshape(-1, 1) * p["w2"]                 # (H1, H2)
    b2f = c1 @ p["w2"] + p["b2"]                      # (1, H2)
    w3f = a2.reshape(-1, 1) * p["w3"]                 # (H2, 1)
    b3f = c2 @ p["w3"] + p["b3"]                      # (1, 1)

    return {
        "w1a": p["w1"][:E].astype(jnp.bfloat16),      # (E, H1)
        "w1b": p["w1"][E:].astype(jnp.bfloat16),      # (E, H1)
        "b1":  p["b1"].astype(jnp.float32),           # (1, H1)
        "w2":  w2f.astype(jnp.bfloat16),              # (H1, H2)
        "b2":  b2f.astype(jnp.float32),               # (1, H2)
        "w3":  w3f.reshape(1, -1).astype(jnp.float32),# (1, H2) row for VPU reduce
        "b3":  b3f.astype(jnp.float32),               # (1, 1)
    }


# ----------------------------------------------------------------------------
# Demo / self-check
# ----------------------------------------------------------------------------
if __name__ == "__main__":
    EMBEDDING_DIM = 64        # concat -> 128 input features
    HIDDEN_DIMS = (512, 256)
    BATCH = 8

    key = jax.random.PRNGKey(0)
    k_p, k_x1, k_x2 = jax.random.split(key, 3)

    params = init_params(k_p, EMBEDDING_DIM, HIDDEN_DIMS)
    kparams = fold_params(params)

    x1 = jax.random.normal(k_x1, (BATCH, EMBEDDING_DIM), jnp.float32)
    x2 = jax.random.normal(k_x2, (BATCH, EMBEDDING_DIM), jnp.float32)

    out = playlist_recommender_forward(x1, x2, kparams)
    out = jax.block_until_ready(out)

    assert out.shape == (BATCH, 1), out.shape
    assert bool(jnp.all((out >= 0.0) & (out <= 1.0)))

    # (1) Exact-semantics reference of what the kernel computes (same folded
    #     bf16 params, same mixed-precision math) -> tight tolerance.
    def ref_folded(x1, x2, kp):
        x1b, x2b = x1.astype(jnp.bfloat16), x2.astype(jnp.bfloat16)
        h = (jnp.dot(x1b, kp["w1a"], preferred_element_type=jnp.float32)
             + jnp.dot(x2b, kp["w1b"], preferred_element_type=jnp.float32))
        h = jnp.maximum(h + kp["b1"], 0.0)
        h = jnp.dot(h.astype(jnp.bfloat16), kp["w2"],
                    preferred_element_type=jnp.float32) + kp["b2"]
        h = jnp.maximum(h, 0.0)
        logit = jnp.sum(h * kp["w3"], axis=-1, keepdims=True) + kp["b3"]
        return jax.nn.sigmoid(logit)

    assert jnp.allclose(out, ref_folded(x1, x2, kparams), atol=2e-3, rtol=2e-3)

    # (2) Full-precision original eval-mode module semantics -> sanity check
    #     that BN folding + bf16 weights preserve the forward pass.
    def ref_full(x1, x2, p):
        x = jnp.concatenate([x1, x2], axis=1)
        h = jnp.maximum(x @ p["w1"] + p["b1"], 0.0)
        h = (h - p["m1"]) / jnp.sqrt(p["v1"] + BN_EPS) * p["g1"] + p["be1"]
        h = jnp.maximum(h @ p["w2"] + p["b2"], 0.0)
        h = (h - p["m2"]) / jnp.sqrt(p["v2"] + BN_EPS) * p["g2"] + p["be2"]
        return jax.nn.sigmoid(h @ p["w3"] + p["b3"])

    assert jnp.allclose(out, ref_full(x1, x2, params), atol=5e-2, rtol=5e-2)

    print("KERNEL_OK")
</pallas_src>

<mosaic_0001>
module attributes {stable_mosaic.version = 11 : i64} {
  func.func @_mlp_kernel(%arg0: i32, %arg1: memref<8x64xbf16, #tpu.memory_space<vmem>>, %arg2: memref<8x64xbf16, #tpu.memory_space<vmem>>, %arg3: memref<64x512xbf16, #tpu.memory_space<vmem>>, %arg4: memref<64x512xbf16, #tpu.memory_space<vmem>>, %arg5: memref<1x512xf32, #tpu.memory_space<vmem>>, %arg6: memref<512x256xbf16, #tpu.memory_space<vmem>>, %arg7: memref<1x256xf32, #tpu.memory_space<vmem>>, %arg8: memref<1x256xf32, #tpu.memory_space<vmem>>, %arg9: memref<1x1xf32, #tpu.memory_space<vmem>>, %arg10: memref<8x1xf32, #tpu.memory_space<vmem>>) attributes {dimension_semantics = [#tpu.dimension_semantics<parallel>], iteration_bounds = array<i64: 1>, scalar_prefetch = 0 : i64, scratch_operands = 0 : i64, tpu.core_type = #tpu.core_type<tc>, window_params = [{transform_indices = @transform_0, window_bounds = array<i64: 8, 64>}, {transform_indices = @transform_1, window_bounds = array<i64: 8, 64>}, {pipeline_mode = #tpu.pipeline_mode<synchronous>, transform_indices = @transform_2, window_bounds = array<i64: 64, 512>}, {pipeline_mode = #tpu.pipeline_mode<synchronous>, transform_indices = @transform_3, window_bounds = array<i64: 64, 512>}, {pipeline_mode = #tpu.pipeline_mode<synchronous>, transform_indices = @transform_4, window_bounds = array<i64: 1, 512>}, {pipeline_mode = #tpu.pipeline_mode<synchronous>, transform_indices = @transform_5, window_bounds = array<i64: 512, 256>}, {pipeline_mode = #tpu.pipeline_mode<synchronous>, transform_indices = @transform_6, window_bounds = array<i64: 1, 256>}, {pipeline_mode = #tpu.pipeline_mode<synchronous>, transform_indices = @transform_7, window_bounds = array<i64: 1, 256>}, {pipeline_mode = #tpu.pipeline_mode<synchronous>, transform_indices = @transform_8, window_bounds = array<i64: 1, 1>}, {transform_indices = @transform_9, window_bounds = array<i64: 8, 1>}]} {
    %c0 = arith.constant 0 : index
    %c0_0 = arith.constant 0 : index
    %0 = vector.load %arg1[%c0, %c0_0] : memref<8x64xbf16, #tpu.memory_space<vmem>>, vector<8x64xbf16>
    %c0_1 = arith.constant 0 : index
    %c0_2 = arith.constant 0 : index
    %1 = vector.load %arg3[%c0_1, %c0_2] : memref<64x512xbf16, #tpu.memory_space<vmem>>, vector<64x512xbf16>
    %cst = arith.constant dense<0.000000e+00> : vector<8x512xf32>
    %2 = tpu.matmul %0, %1, %cst {dimension_numbers = #tpu.dot_dimension_numbers<[1], [0], [0], [1], [0, 0, 1, 1], [], []>} : vector<8x64xbf16>, vector<64x512xbf16>, vector<8x512xf32> -> vector<8x512xf32>
    %c0_3 = arith.constant 0 : index
    %c0_4 = arith.constant 0 : index
    %3 = vector.load %arg2[%c0_3, %c0_4] : memref<8x64xbf16, #tpu.memory_space<vmem>>, vector<8x64xbf16>
    %c0_5 = arith.constant 0 : index
    %c0_6 = arith.constant 0 : index
    %4 = vector.load %arg4[%c0_5, %c0_6] : memref<64x512xbf16, #tpu.memory_space<vmem>>, vector<64x512xbf16>
    %cst_7 = arith.constant dense<0.000000e+00> : vector<8x512xf32>
    %5 = tpu.matmul %3, %4, %cst_7 {dimension_numbers = #tpu.dot_dimension_numbers<[1], [0], [0], [1], [0, 0, 1, 1], [], []>} : vector<8x64xbf16>, vector<64x512xbf16>, vector<8x512xf32> -> vector<8x512xf32>
    %6 = arith.addf %2, %5 : vector<8x512xf32>
    %c0_8 = arith.constant 0 : index
    %c0_9 = arith.constant 0 : index
    %7 = vector.load %arg5[%c0_8, %c0_9] : memref<1x512xf32, #tpu.memory_space<vmem>>, vector<1x512xf32>
    %8 = vector.broadcast %7 : vector<1x512xf32> to vector<8x512xf32>
    %9 = arith.addf %6, %8 : vector<8x512xf32>
    %cst_10 = arith.constant 0.000000e+00 : f32
    %10 = vector.broadcast %cst_10 : f32 to vector<8x512xf32>
    %11 = arith.maximumf %9, %10 : vector<8x512xf32>
    %12 = arith.truncf %11 : vector<8x512xf32> to vector<8x512xbf16>
    %c0_11 = arith.constant 0 : index
    %c0_12 = arith.constant 0 : index
    %13 = vector.load %arg6[%c0_11, %c0_12] : memref<512x256xbf16, #tpu.memory_space<vmem>>, vector<512x256xbf16>
    %cst_13 = arith.constant dense<0.000000e+00> : vector<8x256xf32>
    %14 = tpu.matmul %12, %13, %cst_13 {dimension_numbers = #tpu.dot_dimension_numbers<[1], [0], [0], [1], [0, 0, 1, 1], [], []>} : vector<8x512xbf16>, vector<512x256xbf16>, vector<8x256xf32> -> vector<8x256xf32>
    %c0_14 = arith.constant 0 : index
    %c0_15 = arith.constant 0 : index
    %15 = vector.load %arg7[%c0_14, %c0_15] : memref<1x256xf32, #tpu.memory_space<vmem>>, vector<1x256xf32>
    %16 = vector.broadcast %15 : vector<1x256xf32> to vector<8x256xf32>
    %17 = arith.addf %14, %16 : vector<8x256xf32>
    %cst_16 = arith.constant 0.000000e+00 : f32
    %18 = vector.broadcast %cst_16 : f32 to vector<8x256xf32>
    %19 = arith.maximumf %17, %18 : vector<8x256xf32>
    %c0_17 = arith.constant 0 : index
    %c0_18 = arith.constant 0 : index
    %20 = vector.load %arg8[%c0_17, %c0_18] : memref<1x256xf32, #tpu.memory_space<vmem>>, vector<1x256xf32>
    %21 = vector.broadcast %20 : vector<1x256xf32> to vector<8x256xf32>
    %22 = arith.mulf %19, %21 : vector<8x256xf32>
    %cst_19 = arith.constant dense<0.000000e+00> : vector<8xf32>
    %23 = vector.multi_reduction <add>, %22, %cst_19 [1] : vector<8x256xf32> to vector<8xf32>
    %24 = vector.shape_cast %23 : vector<8xf32> to vector<8x1xf32>
    %c0_20 = arith.constant 0 : index
    %c0_21 = arith.constant 0 : index
    %25 = vector.load %arg9[%c0_20, %c0_21] : memref<1x1xf32, #tpu.memory_space<vmem>>, vector<1x1xf32>
    %26 = vector.broadcast %25 : vector<1x1xf32> to vector<8x1xf32>
    %27 = arith.addf %24, %26 : vector<8x1xf32>
    %28 = arith.negf %27 : vector<8x1xf32>
    %29 = math.exp %28 : vector<8x1xf32>
    %cst_22 = arith.constant 1.000000e+00 : f32
    %30 = vector.broadcast %cst_22 : f32 to vector<8x1xf32>
    %31 = arith.addf %30, %29 : vector<8x1xf32>
    %32 = arith.divf %30, %31 : vector<8x1xf32>
    %c0_23 = arith.constant 0 : index
    %c0_24 = arith.constant 0 : index
    %33 = vector.load %arg10[%c0_23, %c0_24] : memref<8x1xf32, #tpu.memory_space<vmem>>, vector<8x1xf32>
    tpu.vector_store %arg10[%c0_23, %c0_24], %32 {strides = array<i32>} : memref<8x1xf32, #tpu.memory_space<vmem>>, vector<8x1xf32>,
    return
  }
  func.func @transform_0(%arg0: i32) -> (i32, i32) {
    %c0_i32 = arith.constant 0 : i32
    %c0_i32_0 = arith.constant 0 : i32
    return %arg0, %c0_i32 : i32, i32
  }
  func.func @transform_1(%arg0: i32) -> (i32, i32) {
    %c0_i32 = arith.constant 0 : i32
    %c0_i32_0 = arith.constant 0 : i32
    return %arg0, %c0_i32 : i32, i32
  }
  func.func @transform_2(%arg0: i32) -> (i32, i32) {
    %c0_i32 = arith.constant 0 : i32
    %c0_i32_0 = arith.constant 0 : i32
    %c0_i32_1 = arith.constant 0 : i32
    return %c0_i32, %c0_i32_0 : i32, i32
  }
  func.func @transform_3(%arg0: i32) -> (i32, i32) {
    %c0_i32 = arith.constant 0 : i32
    %c0_i32_0 = arith.constant 0 : i32
    %c0_i32_1 = arith.constant 0 : i32
    return %c0_i32, %c0_i32_0 : i32, i32
  }
  func.func @transform_4(%arg0: i32) -> (i32, i32) {
    %c0_i32 = arith.constant 0 : i32
    %c0_i32_0 = arith.constant 0 : i32
    %c0_i32_1 = arith.constant 0 : i32
    return %c0_i32, %c0_i32_0 : i32, i32
  }
  func.func @transform_5(%arg0: i32) -> (i32, i32) {
    %c0_i32 = arith.constant 0 : i32
    %c0_i32_0 = arith.constant 0 : i32
    %c0_i32_1 = arith.constant 0 : i32
    return %c0_i32, %c0_i32_0 : i32, i32
  }
  func.func @transform_6(%arg0: i32) -> (i32, i32) {
    %c0_i32 = arith.constant 0 : i32
    %c0_i32_0 = arith.constant 0 : i32
    %c0_i32_1 = arith.constant 0 : i32
    return %c0_i32, %c0_i32_0 : i32, i32
  }
  func.func @transform_7(%arg0: i32) -> (i32, i32) {
    %c0_i32 = arith.constant 0 : i32
    %c0_i32_0 = arith.constant 0 : i32
    %c0_i32_1 = arith.constant 0 : i32
    return %c0_i32, %c0_i32_0 : i32, i32
  }
  func.func @transform_8(%arg0: i32) -> (i32, i32) {
    %c0_i32 = arith.constant 0 : i32
    %c0_i32_0 = arith.constant 0 : i32
    %c0_i32_1 = arith.constant 0 : i32
    return %c0_i32, %c0_i32_0 : i32, i32
  }
  func.func @transform_9(%arg0: i32) -> (i32, i32) {
    %c0_i32 = arith.constant 0 : i32
    %c0_i32_0 = arith.constant 0 : i32
    return %arg0, %c0_i32 : i32, i32
  }
}

</mosaic_0001>

<llo_original>
// kernel: playlist_recommender_forward.1
$region0: #{playlist_recommender_forward.1}
  #allocation0 [shape = 'u32[]', space=smem, size = 0x4, offset = 0x4, fixed_abs, tag = 'smem constant byte address 0x4 - core index']
  #allocation1 [shape = 'u32[144,128]{1,0:T(1,128)}', space=vmem, size = 0x12000, scoped, tag = 'internal scratch']
  #allocation2 [shape = 'f32[1,1]{1,0:T(1,128)S(1)}', space=vmem, size = 0x200, scoped, tag = 'scoped memory for playlist_recommender_forward.1']
  %s0 = inlined_call_operand.vmem [shape: bf16[8,64], index: 0, kind: input, shape index: {}]
  %s1 = inlined_call_operand.vmem [shape: bf16[8,64], index: 1, kind: input, shape index: {}]
  %s2 = inlined_call_operand.hbm [shape: bf16[64,512], index: 2, kind: input, shape index: {}]
  %s3 = inlined_call_operand.hbm [shape: bf16[64,512], index: 3, kind: input, shape index: {}]
  %s4 = inlined_call_operand.vmem [shape: f32[1,512], index: 4, kind: input, shape index: {}]
  %s5 = inlined_call_operand.hbm [shape: bf16[512,256], index: 5, kind: input, shape index: {}]
  %s6 = inlined_call_operand.vmem [shape: f32[1,256], index: 6, kind: input, shape index: {}]
  %s7 = inlined_call_operand.vmem [shape: f32[1,256], index: 7, kind: input, shape index: {}]
  %s8 = inlined_call_operand.<no memory space> [shape: f32[1,1], index: 8, kind: input, shape index: {}]
  %s9 = inlined_call_operand.vmem [shape: f32[8,1], index: 9, kind: output, shape index: {}]
  %s10 = sld [smem:[#allocation0]]
  $region58: #{playlist_recommender_forward.1} parent=0
    _
  %s12 = ssub.s32 1, %s10
  %s13 = scalar_select 0, %s12, %s10
  %v14 = vstv %s8
  %15 = vst [vmem:[#allocation2] sm:$0x1] %v14
  $region1: #{playlist_recommender_forward.1} parent=0
    #allocation3 [shape = 'u8[65536]{0}', space=vmem, size = 0x10000, scoped, tag = 'input window, operand 2, single buffered']
    #allocation4 [shape = 's32[1]{0}', space=sflag, size = 0x4, scoped, tag = 'scoped memory for playlist_recommender_forward.1']
    #allocation5 [shape = 'u8[65536]{0}', space=vmem, size = 0x10000, scoped, tag = 'input window, operand 3, single buffered']
    #allocation6 [shape = 's32[1]{0}', space=sflag, size = 0x4, scoped, tag = 'scoped memory for playlist_recommender_forward.1']
    #allocation7 [shape = 'u8[262144]{0}', space=vmem, size = 0x40000, scoped, tag = 'input window, operand 5, single buffered']
    %16 = vsyncpa [#allocation4], 0
    %17 = vsyncpa [#allocation6], 0
    // Predicated region
    $region2: #{playlist_recommender_forward.1} parent=1 // pred_check
      _
    $region3: #{playlist_recommender_forward.1} parent=1 // pred_check_branch
      %19 = sbr.rel (0) target = $region5
    $region4: #{playlist_recommender_forward.1} parent=1 // pred_region
      _
    $region5: #{playlist_recommender_forward.1} parent=1 // pred_fallthru
      _
    // Predicated region
    $region6: #{playlist_recommender_forward.1} parent=1 // pred_check
      _
    $region7: #{playlist_recommender_forward.1} parent=1 // pred_check_branch
      %21 = sbr.rel (0) target = $region9
    $region8: #{playlist_recommender_forward.1} parent=1 // pred_region
      _
    $region9: #{playlist_recommender_forward.1} parent=1 // pred_fallthru
      _
    // Predicated region
    $region10: #{playlist_recommender_forward.1} parent=1 // pred_check
      _
    $region11: #{playlist_recommender_forward.1} parent=1 // pred_check_branch
      %23 = sbr.rel (0) target = $region13
    $region12: #{playlist_recommender_forward.1} parent=1 // pred_region
      %s25 = ssub.s32 2048, 2048
      %26 = vsyncadd [#allocation4], %s25
      %s27 = sshll.u32 [#allocation3], 4
      %s28 = int_to_ptr.vmem [resolvable:$true] %s27
      %33 = dma.hbm_to_vmem [thread:$0]  %s2, 2048, %s28, [#allocation4], 256, 256, 16
    $region13: #{playlist_recommender_forward.1} parent=1 // pred_fallthru
      _
    // Predicated region
    $region14: #{playlist_recommender_forward.1} parent=1 // pred_check
      _
    $region15: #{playlist_recommender_forward.1} parent=1 // pred_check_branch
      %35 = sbr.rel (0) target = $region17
    $region16: #{playlist_recommender_forward.1} parent=1 // pred_region
      %s37 = ssub.s32 2048, 2048
      %38 = vsyncadd [#allocation6], %s37
      %s39 = sshll.u32 [#allocation5], 4
      %s40 = int_to_ptr.vmem [resolvable:$true] %s39
      %45 = dma.hbm_to_vmem [thread:$0]  %s3, 2048, %s40, [#allocation6], 256, 256, 16
    $region17: #{playlist_recommender_forward.1} parent=1 // pred_fallthru
      _
    // Predicated region
    $region18: #{playlist_recommender_forward.1} parent=1 // pred_check
      _
    $region19: #{playlist_recommender_forward.1} parent=1 // pred_check_branch
      %47 = sbr.rel (0) target = $region21
    $region20: #{playlist_recommender_forward.1} parent=1 // pred_region
      _
    $region21: #{playlist_recommender_forward.1} parent=1 // pred_fallthru
      _
    // Predicated region
    $region22: #{playlist_recommender_forward.1} parent=1 // pred_check
      _
    $region23: #{playlist_recommender_forward.1} parent=1 // pred_check_branch
      %49 = sbr.rel (0) target = $region25
    $region24: #{playlist_recommender_forward.1} parent=1 // pred_region
      %s51 = ssub.s32 8192, 8192
      %52 = vsyncadd [#allocation6], %s51
      %s53 = sshll.u32 [#allocation7], 4
      %s54 = int_to_ptr.vmem [resolvable:$true] %s53
      %59 = dma.hbm_to_vmem [thread:$0]  %s5, 8192, %s54, [#allocation6], 128, 128, 8
    $region25: #{playlist_recommender_forward.1} parent=1 // pred_fallthru
      _
    // Predicated region
    $region26: #{playlist_recommender_forward.1} parent=1 // pred_check
      _
    $region27: #{playlist_recommender_forward.1} parent=1 // pred_check_branch
      %61 = sbr.rel (0) target = $region29
    $region28: #{playlist_recommender_forward.1} parent=1 // pred_region
      _
    $region29: #{playlist_recommender_forward.1} parent=1 // pred_fallthru
      _
    // Predicated region
    $region30: #{playlist_recommender_forward.1} parent=1 // pred_check
      _
    $region31: #{playlist_recommender_forward.1} parent=1 // pred_check_branch
      %63 = sbr.rel (0) target = $region33
    $region32: #{playlist_recommender_forward.1} parent=1 // pred_region
      _
    $region33: #{playlist_recommender_forward.1} parent=1 // pred_fallthru
      _
    // Predicated region
    $region34: #{playlist_recommender_forward.1} parent=1 // pred_check
      _
    $region35: #{playlist_recommender_forward.1} parent=1 // pred_check_branch
      %65 = sbr.rel (0) target = $region37
    $region36: #{playlist_recommender_forward.1} parent=1 // pred_region
      _
    $region37: #{playlist_recommender_forward.1} parent=1 // pred_fallthru
      _
    // Predicated region
    $region38: #{playlist_recommender_forward.1} parent=1 // pred_check
      _
    $region39: #{playlist_recommender_forward.1} parent=1 // pred_check_branch
      %67 = sbr.rel (0) target = $region41
    $region40: #{playlist_recommender_forward.1} parent=1 // pred_region
      %68 = dma.done [#allocation4], 2048
    $region41: #{playlist_recommender_forward.1} parent=1 // pred_fallthru
      _
    // Predicated region
    $region42: #{playlist_recommender_forward.1} parent=1 // pred_check
      _
    $region43: #{playlist_recommender_forward.1} parent=1 // pred_check_branch
      %70 = sbr.rel (0) target = $region45
    $region44: #{playlist_recommender_forward.1} parent=1 // pred_region
      %71 = dma.done [#allocation6], 2048
    $region45: #{playlist_recommender_forward.1} parent=1 // pred_fallthru
      _
    // Predicated region
    $region46: #{playlist_recommender_forward.1} parent=1 // pred_check
      _
    $region47: #{playlist_recommender_forward.1} parent=1 // pred_check_branch
      %73 = sbr.rel (0) target = $region49
    $region48: #{playlist_recommender_forward.1} parent=1 // pred_region
      %74 = dma.done [#allocation6], 8192
    $region49: #{playlist_recommender_forward.1} parent=1 // pred_fallthru
      _
    %v76 = vld [vmem:[%s0] sm:$0xf]
    %v77 = vld [vmem:[#allocation3] sm:$0xff]
    %v78 = vld [vmem:[#allocation3 + $0x8] sm:$0xff]
    %v79 = vld [vmem:[#allocation3 + $0x10] sm:$0xff]
    %v80 = vld [vmem:[#allocation3 + $0x18] sm:$0xff]
    %v81 = vld [vmem:[#allocation3 + $0x20] sm:$0xff]
    %v82 = vld [vmem:[#allocation3 + $0x28] sm:$0xff]
    %v83 = vld [vmem:[#allocation3 + $0x30] sm:$0xff]
    %v84 = vld [vmem:[#allocation3 + $0x38] sm:$0xff]
    %v85 = vld [vmem:[#allocation3 + $0x40] sm:$0xff]
    %v86 = vld [vmem:[#allocation3 + $0x48] sm:$0xff]
    %v87 = vld [vmem:[#allocation3 + $0x50] sm:$0xff]
    %v88 = vld [vmem:[#allocation3 + $0x58] sm:$0xff]
    %v89 = vld [vmem:[#allocation3 + $0x60] sm:$0xff]
    %v90 = vld [vmem:[#allocation3 + $0x68] sm:$0xff]
    %v91 = vld [vmem:[#allocation3 + $0x70] sm:$0xff]
    %v92 = vld [vmem:[#allocation3 + $0x78] sm:$0xff]
    %v93 = vld [vmem:[%s1] sm:$0xf]
    %v94 = vld [vmem:[#allocation5] sm:$0xff]
    %v95 = vld [vmem:[#allocation5 + $0x8] sm:$0xff]
    %v96 = vld [vmem:[#allocation5 + $0x10] sm:$0xff]
    %v97 = vld [vmem:[#allocation5 + $0x18] sm:$0xff]
    %v98 = vld [vmem:[#allocation5 + $0x20] sm:$0xff]
    %v99 = vld [vmem:[#allocation5 + $0x28] sm:$0xff]
    %v100 = vld [vmem:[#allocation5 + $0x30] sm:$0xff]
    %v101 = vld [vmem:[#allocation5 + $0x38] sm:$0xff]
    %v102 = vld [vmem:[#allocation5 + $0x40] sm:$0xff]
    %v103 = vld [vmem:[#allocation5 + $0x48] sm:$0xff]
    %v104 = vld [vmem:[#allocation5 + $0x50] sm:$0xff]
    %v105 = vld [vmem:[#allocation5 + $0x58] sm:$0xff]
    %v106 = vld [vmem:[#allocation5 + $0x60] sm:$0xff]
    %v107 = vld [vmem:[#allocation5 + $0x68] sm:$0xff]
    %v108 = vld [vmem:[#allocation5 + $0x70] sm:$0xff]
    %v109 = vld [vmem:[#allocation5 + $0x78] sm:$0xff]
    %v126 = vunpack.c.l.b16 %v94
    %v127 = vunpack.c.h.b16 %v94
    %v128 = vunpack.c.l.b16 %v95
    %v129 = vunpack.c.h.b16 %v95
    %v130 = vunpack.c.l.b16 %v96
    %v131 = vunpack.c.h.b16 %v96
    %v132 = vunpack.c.l.b16 %v97
    %v133 = vunpack.c.h.b16 %v97
    %v134 = vunpack.c.l.b16 %v98
    %v135 = vunpack.c.h.b16 %v98
    %v136 = vunpack.c.l.b16 %v99
    %v137 = vunpack.c.h.b16 %v99
    %v138 = vunpack.c.l.b16 %v100
    %v139 = vunpack.c.h.b16 %v100
    %v140 = vunpack.c.l.b16 %v101
    %v141 = vunpack.c.h.b16 %v101
    %v142 = vunpack.c.l.b16 %v102
    %v143 = vunpack.c.h.b16 %v102
    %v144 = vunpack.c.l.b16 %v103
    %v145 = vunpack.c.h.b16 %v103
    %v146 = vunpack.c.l.b16 %v104
    %v147 = vunpack.c.h.b16 %v104
    %v148 = vunpack.c.l.b16 %v105
    %v149 = vunpack.c.h.b16 %v105
    %v150 = vunpack.c.l.b16 %v106
    %v151 = vunpack.c.h.b16 %v106
    %v152 = vunpack.c.l.b16 %v107
    %v153 = vunpack.c.h.b16 %v107
    %v154 = vunpack.c.l.b16 %v108
    %v155 = vunpack.c.h.b16 %v108
    %v156 = vunpack.c.l.b16 %v109
    %v157 = vunpack.c.h.b16 %v109
    %v158 = vpack.c.b16 %v130, %v126
    %v159 = vpack.c.b16 %v131, %v127
    %v160 = vpack.c.b16 %v132, %v128
    %v161 = vpack.c.b16 %v133, %v129
    %v162 = vpack.c.b16 %v138, %v134
    %v163 = vpack.c.b16 %v139, %v135
    %v164 = vpack.c.b16 %v140, %v136
    %v165 = vpack.c.b16 %v141, %v137
    %v166 = vpack.c.b16 %v146, %v142
    %v167 = vpack.c.b16 %v147, %v143
    %v168 = vpack.c.b16 %v148, %v144
    %v169 = vpack.c.b16 %v149, %v145
    %v170 = vpack.c.b16 %v154, %v150
    %v171 = vpack.c.b16 %v155, %v151
    %v172 = vpack.c.b16 %v156, %v152
    %v173 = vpack.c.b16 %v157, %v153
    %vm190 = vcmask 523264
    %v192 = vsel %vm190, %v93, 0
    %194 = vmatprep.subr.bf16.mxu0 %v159
    %195 = vmatpush1.bf16.msra.mxu0 %v158
    %196 = vmatprep.subr.bf16.mxu0 %v163
    %197 = vmatpush1.bf16.msra.mxu0 %v162
    %198 = vmatprep.subr.bf16.mxu0 %v167
    %199 = vmatpush1.bf16.msra.mxu0 %v166
    %200 = vmatprep.subr.bf16.mxu0 %v171
    %201 = vmatpush1.bf16.msra.mxu0 %v170
    %202 = vmatprep.subr.bf16.mxu0 0
    %203 = vmatpush1.bf16.msra.mxu0 0
    %204 = vmatprep.subr.bf16.mxu0 0
    %205 = vmatpush1.bf16.msra.mxu0 0
    %206 = vmatprep.subr.bf16.mxu0 0
    %207 = vmatpush1.bf16.msra.mxu0 0
    %208 = vmatprep.subr.bf16.mxu0 0
    %209 = vmatpush1.bf16.msra.mxu0 0
    %210 = vmatprep.subr.bf16.mxu0 0
    %211 = vmatpush1.bf16.msra.mxu0 0
    %212 = vmatprep.subr.bf16.mxu0 0
    %213 = vmatpush1.bf16.msra.mxu0 0
    %214 = vmatprep.subr.bf16.mxu0 0
    %215 = vmatpush1.bf16.msra.mxu0 0
    %216 = vmatprep.subr.bf16.mxu0 0
    %217 = vmatpush1.bf16.msra.mxu0 0
    %218 = vmatprep.subr.bf16.mxu0 0
    %219 = vmatpush1.bf16.msra.mxu0 0
    %220 = vmatprep.subr.bf16.mxu0 0
    %221 = vmatpush1.bf16.msra.mxu0 0
    %222 = vmatprep.subr.bf16.mxu0 0
    %223 = vmatpush1.bf16.msra.mxu0 0
    %224 = vmatprep.subr.bf16.mxu0 0
    %225 = vmatpush1.bf16.msra.mxu0 0
    %226 = vmatprep.mubr.bf16.mxu0 0
    %227 = vmatmul.mubr.bf16.gmra.mrb[0].mxu0 %v192
    %v228 = vpop.f32.mrb[0].mxu0
    %v229 = vadd.f32 0.0, %v228
    %v230 = vpop.f32.mrb[0].mxu0
    %v231 = vadd.f32 0.0, %v230
    %v232 = vpop.f32.mrb[0].mxu0
    %v233 = vpop.f32.mrb[0].mxu0
    %234 = vdwg.mxu0
    %235 = vmatprep.subr.bf16.mxu0 %v161
    %236 = vmatpush1.bf16.msra.mxu0 %v160
    %237 = vmatprep.subr.bf16.mxu0 %v165
    %238 = vmatpush1.bf16.msra.mxu0 %v164
    %239 = vmatprep.subr.bf16.mxu0 %v169
    %240 = vmatpush1.bf16.msra.mxu0 %v168
    %241 = vmatprep.subr.bf16.mxu0 %v173
    %242 = vmatpush1.bf16.msra.mxu0 %v172
    %243 = vmatprep.subr.bf16.mxu0 0
    %244 = vmatpush1.bf16.msra.mxu0 0
    %245 = vmatprep.subr.bf16.mxu0 0
    %246 = vmatpush1.bf16.msra.mxu0 0
    %247 = vmatprep.subr.bf16.mxu0 0
    %248 = vmatpush1.bf16.msra.mxu0 0
    %249 = vmatprep.subr.bf16.mxu0 0
    %250 = vmatpush1.bf16.msra.mxu0 0
    %251 = vmatprep.subr.bf16.mxu0 0
    %252 = vmatpush1.bf16.msra.mxu0 0
    %253 = vmatprep.subr.bf16.mxu0 0
    %254 = vmatpush1.bf16.msra.mxu0 0
    %255 = vmatprep.subr.bf16.mxu0 0
    %256 = vmatpush1.bf16.msra.mxu0 0
    %257 = vmatprep.subr.bf16.mxu0 0
    %258 = vmatpush1.bf16.msra.mxu0 0
    %259 = vmatprep.subr.bf16.mxu0 0
    %260 = vmatpush1.bf16.msra.mxu0 0
    %261 = vmatprep.subr.bf16.mxu0 0
    %262 = vmatpush1.bf16.msra.mxu0 0
    %263 = vmatprep.subr.bf16.mxu0 0
    %264 = vmatpush1.bf16.msra.mxu0 0
    %265 = vmatprep.subr.bf16.mxu0 0
    %266 = vmatpush1.bf16.msra.mxu0 0
    %267 = vmatprep.mubr.bf16.mxu0 0
    %268 = vmatmul.mubr.bf16.gmra.mrb[0].mxu0 %v192
    %v269 = vpop.f32.mrb[0].mxu0
    %v270 = vadd.f32 0.0, %v269
    %v271 = vpop.f32.mrb[0].mxu0
    %v272 = vadd.f32 0.0, %v271
    %v273 = vpop.f32.mrb[0].mxu0
    %v274 = vpop.f32.mrb[0].mxu0
    %275 = vdwg.mxu0
    %v292 = vunpack.c.l.b16 %v77
    %v293 = vunpack.c.h.b16 %v77
    %v294 = vunpack.c.l.b16 %v78
    %v295 = vunpack.c.h.b16 %v78
    %v296 = vunpack.c.l.b16 %v79
    %v297 = vunpack.c.h.b16 %v79
    %v298 = vunpack.c.l.b16 %v80
    %v299 = vunpack.c.h.b16 %v80
    %v300 = vunpack.c.l.b16 %v81
    %v301 = vunpack.c.h.b16 %v81
    %v302 = vunpack.c.l.b16 %v82
    %v303 = vunpack.c.h.b16 %v82
    %v304 = vunpack.c.l.b16 %v83
    %v305 = vunpack.c.h.b16 %v83
    %v306 = vunpack.c.l.b16 %v84
    %v307 = vunpack.c.h.b16 %v84
    %v308 = vunpack.c.l.b16 %v85
    %v309 = vunpack.c.h.b16 %v85
    %v310 = vunpack.c.l.b16 %v86
    %v311 = vunpack.c.h.b16 %v86
    %v312 = vunpack.c.l.b16 %v87
    %v313 = vunpack.c.h.b16 %v87
    %v314 = vunpack.c.l.b16 %v88
    %v315 = vunpack.c.h.b16 %v88
    %v316 = vunpack.c.l.b16 %v89
    %v317 = vunpack.c.h.b16 %v89
    %v318 = vunpack.c.l.b16 %v90
    %v319 = vunpack.c.h.b16 %v90
    %v320 = vunpack.c.l.b16 %v91
    %v321 = vunpack.c.h.b16 %v91
    %v322 = vunpack.c.l.b16 %v92
    %v323 = vunpack.c.h.b16 %v92
    %v324 = vpack.c.b16 %v296, %v292
    %v325 = vpack.c.b16 %v297, %v293
    %v326 = vpack.c.b16 %v298, %v294
    %v327 = vpack.c.b16 %v299, %v295
    %v328 = vpack.c.b16 %v304, %v300
    %v329 = vpack.c.b16 %v305, %v301
    %v330 = vpack.c.b16 %v306, %v302
    %v331 = vpack.c.b16 %v307, %v303
    %v332 = vpack.c.b16 %v312, %v308
    %v333 = vpack.c.b16 %v313, %v309
    %v334 = vpack.c.b16 %v314, %v310
    %v335 = vpack.c.b16 %v315, %v311
    %v336 = vpack.c.b16 %v320, %v316
    %v337 = vpack.c.b16 %v321, %v317
    %v338 = vpack.c.b16 %v322, %v318
    %v339 = vpack.c.b16 %v323, %v319
    %v357 = vsel %vm190, %v76, 0
    %359 = vmatprep.subr.bf16.mxu0 %v325
    %360 = vmatpush1.bf16.msra.mxu0 %v324
    %361 = vmatprep.subr.bf16.mxu0 %v329
    %362 = vmatpush1.bf16.msra.mxu0 %v328
    %363 = vmatprep.subr.bf16.mxu0 %v333
    %364 = vmatpush1.bf16.msra.mxu0 %v332
    %365 = vmatprep.subr.bf16.mxu0 %v337
    %366 = vmatpush1.bf16.msra.mxu0 %v336
    %367 = vmatprep.subr.bf16.mxu0 0
    %368 = vmatpush1.bf16.msra.mxu0 0
    %369 = vmatprep.subr.bf16.mxu0 0
    %370 = vmatpush1.bf16.msra.mxu0 0
    %371 = vmatprep.subr.bf16.mxu0 0
    %372 = vmatpush1.bf16.msra.mxu0 0
    %373 = vmatprep.subr.bf16.mxu0 0
    %374 = vmatpush1.bf16.msra.mxu0 0
    %375 = vmatprep.subr.bf16.mxu0 0
    %376 = vmatpush1.bf16.msra.mxu0 0
    %377 = vmatprep.subr.bf16.mxu0 0
    %378 = vmatpush1.bf16.msra.mxu0 0
    %379 = vmatprep.subr.bf16.mxu0 0
    %380 = vmatpush1.bf16.msra.mxu0 0
    %381 = vmatprep.subr.bf16.mxu0 0
    %382 = vmatpush1.bf16.msra.mxu0 0
    %383 = vmatprep.subr.bf16.mxu0 0
    %384 = vmatpush1.bf16.msra.mxu0 0
    %385 = vmatprep.subr.bf16.mxu0 0
    %386 = vmatpush1.bf16.msra.mxu0 0
    %387 = vmatprep.subr.bf16.mxu0 0
    %388 = vmatpush1.bf16.msra.mxu0 0
    %389 = vmatprep.subr.bf16.mxu0 0
    %390 = vmatpush1.bf16.msra.mxu0 0
    %391 = vmatprep.mubr.bf16.mxu0 0
    %392 = vmatmul.mubr.bf16.gmra.mrb[0].mxu0 %v357
    %v393 = vpop.f32.mrb[0].mxu0
    %v394 = vadd.f32 %v229, %v393
    %v395 = vpop.f32.mrb[0].mxu0
    %v396 = vadd.f32 %v231, %v395
    %v397 = vpop.f32.mrb[0].mxu0
    %v398 = vpop.f32.mrb[0].mxu0
    %399 = vdwg.mxu0
    %400 = vmatprep.subr.bf16.mxu0 %v327
    %401 = vmatpush1.bf16.msra.mxu0 %v326
    %402 = vmatprep.subr.bf16.mxu0 %v331
    %403 = vmatpush1.bf16.msra.mxu0 %v330
    %404 = vmatprep.subr.bf16.mxu0 %v335
    %405 = vmatpush1.bf16.msra.mxu0 %v334
    %406 = vmatprep.subr.bf16.mxu0 %v339
    %407 = vmatpush1.bf16.msra.mxu0 %v338
    %408 = vmatprep.subr.bf16.mxu0 0
    %409 = vmatpush1.bf16.msra.mxu0 0
    %410 = vmatprep.subr.bf16.mxu0 0
    %411 = vmatpush1.bf16.msra.mxu0 0
    %412 = vmatprep.subr.bf16.mxu0 0
    %413 = vmatpush1.bf16.msra.mxu0 0
    %414 = vmatprep.subr.bf16.mxu0 0
    %415 = vmatpush1.bf16.msra.mxu0 0
    %416 = vmatprep.subr.bf16.mxu0 0
    %417 = vmatpush1.bf16.msra.mxu0 0
    %418 = vmatprep.subr.bf16.mxu0 0
    %419 = vmatpush1.bf16.msra.mxu0 0
    %420 = vmatprep.subr.bf16.mxu0 0
    %421 = vmatpush1.bf16.msra.mxu0 0
    %422 = vmatprep.subr.bf16.mxu0 0
    %423 = vmatpush1.bf16.msra.mxu0 0
    %424 = vmatprep.subr.bf16.mxu0 0
    %425 = vmatpush1.bf16.msra.mxu0 0
    %426 = vmatprep.subr.bf16.mxu0 0
    %427 = vmatpush1.bf16.msra.mxu0 0
    %428 = vmatprep.subr.bf16.mxu0 0
    %429 = vmatpush1.bf16.msra.mxu0 0
    %430 = vmatprep.subr.bf16.mxu0 0
    %431 = vmatpush1.bf16.msra.mxu0 0
    %432 = vmatprep.mubr.bf16.mxu0 0
    %433 = vmatmul.mubr.bf16.gmra.mrb[0].mxu0 %v357
    %v434 = vpop.f32.mrb[0].mxu0
    %v435 = vadd.f32 %v270, %v434
    %v436 = vpop.f32.mrb[0].mxu0
    %v437 = vadd.f32 %v272, %v436
    %v438 = vpop.f32.mrb[0].mxu0
    %v439 = vpop.f32.mrb[0].mxu0
    %440 = vdwg.mxu0
    %v441 = vld [vmem:[%s4] sm:$0xf]
    %v443 = vlaneseq
    %v444 = vshrl.u32 %v443, 7
    %v445 = vsub.s32 0, %v444
    %v446 = vrot.slane %v441, %v445
    %v447 = vlaneseq
    %v448 = vshrl.u32 %v447, 7
    %v449 = vsub.s32 1, %v448
    %v450 = vrot.slane %v441, %v449
    %v451 = vlaneseq
    %v452 = vshrl.u32 %v451, 7
    %v453 = vsub.s32 2, %v452
    %v454 = vrot.slane %v441, %v453
    %v455 = vlaneseq
    %v456 = vshrl.u32 %v455, 7
    %v457 = vsub.s32 3, %v456
    %v458 = vrot.slane %v441, %v457
    %v463 = vadd.f32 %v394, %v446
    %v464 = vadd.f32 %v396, %v450
    %v465 = vadd.f32 %v435, %v454
    %v466 = vadd.f32 %v437, %v458
    %v467 = vmax.f32 %v463, 0.0
    %v468 = vmax.f32 %v464, 0.0
    %v469 = vmax.f32 %v465, 0.0
    %v470 = vmax.f32 %v466, 0.0
    %v471 = vpack.c.bf16 %v467, %v467
    %v472 = vpack.c.bf16 %v468, %v468
    %v473 = vpack.c.bf16 %v469, %v469
    %v474 = vpack.c.bf16 %v470, %v470
    %v475 = vld [vmem:[#allocation7] sm:$0xff]
    %v476 = vld [vmem:[#allocation7 + $0x8] sm:$0xff]
    %v477 = vld [vmem:[#allocation7 + $0x10] sm:$0xff]
    %v478 = vld [vmem:[#allocation7 + $0x18] sm:$0xff]
    %v479 = vld [vmem:[#allocation7 + $0x20] sm:$0xff]
    %v480 = vld [vmem:[#allocation7 + $0x28] sm:$0xff]
    %v481 = vld [vmem:[#allocation7 + $0x30] sm:$0xff]
    %v482 = vld [vmem:[#allocation7 + $0x38] sm:$0xff]
    %v483 = vld [vmem:[#allocation7 + $0x40] sm:$0xff]
    %v484 = vld [vmem:[#allocation7 + $0x48] sm:$0xff]
    %v485 = vld [vmem:[#allocation7 + $0x50] sm:$0xff]
    %v486 = vld [vmem:[#allocation7 + $0x58] sm:$0xff]
    %v487 = vld [vmem:[#allocation7 + $0x60] sm:$0xff]
    %v488 = vld [vmem:[#allocation7 + $0x68] sm:$0xff]
    %v489 = vld [vmem:[#allocation7 + $0x70] sm:$0xff]
    %v490 = vld [vmem:[#allocation7 + $0x78] sm:$0xff]
    %v491 = vld [vmem:[#allocation7 + $0x80] sm:$0xff]
    %v492 = vld [vmem:[#allocation7 + $0x88] sm:$0xff]
    %v493 = vld [vmem:[#allocation7 + $0x90] sm:$0xff]
    %v494 = vld [vmem:[#allocation7 + $0x98] sm:$0xff]
    %v495 = vld [vmem:[#allocation7 + $0xa0] sm:$0xff]
    %v496 = vld [vmem:[#allocation7 + $0xa8] sm:$0xff]
    %v497 = vld [vmem:[#allocation7 + $0xb0] sm:$0xff]
    %v498 = vld [vmem:[#allocation7 + $0xb8] sm:$0xff]
    %v499 = vld [vmem:[#allocation7 + $0xc0] sm:$0xff]
    %v500 = vld [vmem:[#allocation7 + $0xc8] sm:$0xff]
    %v501 = vld [vmem:[#allocation7 + $0xd0] sm:$0xff]
    %v502 = vld [vmem:[#allocation7 + $0xd8] sm:$0xff]
    %v503 = vld [vmem:[#allocation7 + $0xe0] sm:$0xff]
    %v504 = vld [vmem:[#allocation7 + $0xe8] sm:$0xff]
    %v505 = vld [vmem:[#allocation7 + $0xf0] sm:$0xff]
    %v506 = vld [vmem:[#allocation7 + $0xf8] sm:$0xff]
    %v507 = vld [vmem:[#allocation7 + $0x100] sm:$0xff]
    %v508 = vld [vmem:[#allocation7 + $0x108] sm:$0xff]
    %v509 = vld [vmem:[#allocation7 + $0x110] sm:$0xff]
    %v510 = vld [vmem:[#allocation7 + $0x118] sm:$0xff]
    %v511 = vld [vmem:[#allocation7 + $0x120] sm:$0xff]
    %v512 = vld [vmem:[#allocation7 + $0x128] sm:$0xff]
    %v513 = vld [vmem:[#allocation7 + $0x130] sm:$0xff]
    %v514 = vld [vmem:[#allocation7 + $0x138] sm:$0xff]
    %v515 = vld [vmem:[#allocation7 + $0x140] sm:$0xff]
    %v516 = vld [vmem:[#allocation7 + $0x148] sm:$0xff]
    %v517 = vld [vmem:[#allocation7 + $0x150] sm:$0xff]
    %v518 = vld [vmem:[#allocation7 + $0x158] sm:$0xff]
    %v519 = vld [vmem:[#allocation7 + $0x160] sm:$0xff]
    %v520 = vld [vmem:[#allocation7 + $0x168] sm:$0xff]
    %v521 = vld [vmem:[#allocation7 + $0x170] sm:$0xff]
    %v522 = vld [vmem:[#allocation7 + $0x178] sm:$0xff]
    %v523 = vld [vmem:[#allocation7 + $0x180] sm:$0xff]
    %v524 = vld [vmem:[#allocation7 + $0x188] sm:$0xff]
    %v525 = vld [vmem:[#allocation7 + $0x190] sm:$0xff]
    %v526 = vld [vmem:[#allocation7 + $0x198] sm:$0xff]
    %v527 = vld [vmem:[#allocation7 + $0x1a0] sm:$0xff]
    %v528 = vld [vmem:[#allocation7 + $0x1a8] sm:$0xff]
    %v529 = vld [vmem:[#allocation7 + $0x1b0] sm:$0xff]
    %v530 = vld [vmem:[#allocation7 + $0x1b8] sm:$0xff]
    %v531 = vld [vmem:[#allocation7 + $0x1c0] sm:$0xff]
    %v532 = vld [vmem:[#allocation7 + $0x1c8] sm:$0xff]
    %v533 = vld [vmem:[#allocation7 + $0x1d0] sm:$0xff]
    %v534 = vld [vmem:[#allocation7 + $0x1d8] sm:$0xff]
    %v535 = vld [vmem:[#allocation7 + $0x1e0] sm:$0xff]
    %v536 = vld [vmem:[#allocation7 + $0x1e8] sm:$0xff]
    %v537 = vld [vmem:[#allocation7 + $0x1f0] sm:$0xff]
    %v538 = vld [vmem:[#allocation7 + $0x1f8] sm:$0xff]
    %v539 = vld [vmem:[%s6] sm:$0x3]
    %v541 = vlaneseq
    %v542 = vshrl.u32 %v541, 7
    %v543 = vsub.s32 0, %v542
    %v544 = vrot.slane %v539, %v543
    %v545 = vlaneseq
    %v546 = vshrl.u32 %v545, 7
    %v547 = vsub.s32 1, %v546
    %v548 = vrot.slane %v539, %v547
    %v615 = vunpack.c.l.b16 %v475
    %v616 = vunpack.c.h.b16 %v475
    %v617 = vunpack.c.l.b16 %v476
    %v618 = vunpack.c.h.b16 %v476
    %v619 = vunpack.c.l.b16 %v477
    %v620 = vunpack.c.h.b16 %v477
    %v621 = vunpack.c.l.b16 %v478
    %v622 = vunpack.c.h.b16 %v478
    %v623 = vunpack.c.l.b16 %v479
    %v624 = vunpack.c.h.b16 %v479
    %v625 = vunpack.c.l.b16 %v480
    %v626 = vunpack.c.h.b16 %v480
    %v627 = vunpack.c.l.b16 %v481
    %v628 = vunpack.c.h.b16 %v481
    %v629 = vunpack.c.l.b16 %v482
    %v630 = vunpack.c.h.b16 %v482
    %v631 = vunpack.c.l.b16 %v483
    %v632 = vunpack.c.h.b16 %v483
    %v633 = vunpack.c.l.b16 %v484
    %v634 = vunpack.c.h.b16 %v484
    %v635 = vunpack.c.l.b16 %v485
    %v636 = vunpack.c.h.b16 %v485
    %v637 = vunpack.c.l.b16 %v486
    %v638 = vunpack.c.h.b16 %v486
    %v639 = vunpack.c.l.b16 %v487
    %v640 = vunpack.c.h.b16 %v487
    %v641 = vunpack.c.l.b16 %v488
    %v642 = vunpack.c.h.b16 %v488
    %v643 = vunpack.c.l.b16 %v489
    %v644 = vunpack.c.h.b16 %v489
    %v645 = vunpack.c.l.b16 %v490
    %v646 = vunpack.c.h.b16 %v490
    %v647 = vunpack.c.l.b16 %v491
    %v648 = vunpack.c.h.b16 %v491
    %v649 = vunpack.c.l.b16 %v492
    %v650 = vunpack.c.h.b16 %v492
    %v651 = vunpack.c.l.b16 %v493
    %v652 = vunpack.c.h.b16 %v493
    %v653 = vunpack.c.l.b16 %v494
    %v654 = vunpack.c.h.b16 %v494
    %v655 = vunpack.c.l.b16 %v495
    %v656 = vunpack.c.h.b16 %v495
    %v657 = vunpack.c.l.b16 %v496
    %v658 = vunpack.c.h.b16 %v496
    %v659 = vunpack.c.l.b16 %v497
    %v660 = vunpack.c.h.b16 %v497
    %v661 = vunpack.c.l.b16 %v498
    %v662 = vunpack.c.h.b16 %v498
    %v663 = vunpack.c.l.b16 %v499
    %v664 = vunpack.c.h.b16 %v499
    %v665 = vunpack.c.l.b16 %v500
    %v666 = vunpack.c.h.b16 %v500
    %v667 = vunpack.c.l.b16 %v501
    %v668 = vunpack.c.h.b16 %v501
    %v669 = vunpack.c.l.b16 %v502
    %v670 = vunpack.c.h.b16 %v502
    %v671 = vunpack.c.l.b16 %v503
    %v672 = vunpack.c.h.b16 %v503
    %v673 = vunpack.c.l.b16 %v504
    %v674 = vunpack.c.h.b16 %v504
    %v675 = vunpack.c.l.b16 %v505
    %v676 = vunpack.c.h.b16 %v505
    %v677 = vunpack.c.l.b16 %v506
    %v678 = vunpack.c.h.b16 %v506
    %v679 = vunpack.c.l.b16 %v507
    %v680 = vunpack.c.h.b16 %v507
    %v681 = vunpack.c.l.b16 %v508
    %v682 = vunpack.c.h.b16 %v508
    %v683 = vunpack.c.l.b16 %v509
    %v684 = vunpack.c.h.b16 %v509
    %v685 = vunpack.c.l.b16 %v510
    %v686 = vunpack.c.h.b16 %v510
    %v687 = vunpack.c.l.b16 %v511
    %v688 = vunpack.c.h.b16 %v511
    %v689 = vunpack.c.l.b16 %v512
    %v690 = vunpack.c.h.b16 %v512
    %v691 = vunpack.c.l.b16 %v513
    %v692 = vunpack.c.h.b16 %v513
    %v693 = vunpack.c.l.b16 %v514
    %v694 = vunpack.c.h.b16 %v514
    %v695 = vunpack.c.l.b16 %v515
    %v696 = vunpack.c.h.b16 %v515
    %v697 = vunpack.c.l.b16 %v516
    %v698 = vunpack.c.h.b16 %v516
    %v699 = vunpack.c.l.b16 %v517
    %v700 = vunpack.c.h.b16 %v517
    %v701 = vunpack.c.l.b16 %v518
    %v702 = vunpack.c.h.b16 %v518
    %v703 = vunpack.c.l.b16 %v519
    %v704 = vunpack.c.h.b16 %v519
    %v705 = vunpack.c.l.b16 %v520
    %v706 = vunpack.c.h.b16 %v520
    %v707 = vunpack.c.l.b16 %v521
    %v708 = vunpack.c.h.b16 %v521
    %v709 = vunpack.c.l.b16 %v522
    %v710 = vunpack.c.h.b16 %v522
    %v711 = vunpack.c.l.b16 %v523
    %v712 = vunpack.c.h.b16 %v523
    %v713 = vunpack.c.l.b16 %v524
    %v714 = vunpack.c.h.b16 %v524
    %v715 = vunpack.c.l.b16 %v525
    %v716 = vunpack.c.h.b16 %v525
    %v717 = vunpack.c.l.b16 %v526
    %v718 = vunpack.c.h.b16 %v526
    %v719 = vunpack.c.l.b16 %v527
    %v720 = vunpack.c.h.b16 %v527
    %v721 = vunpack.c.l.b16 %v528
    %v722 = vunpack.c.h.b16 %v528
    %v723 = vunpack.c.l.b16 %v529
    %v724 = vunpack.c.h.b16 %v529
    %v725 = vunpack.c.l.b16 %v530
    %v726 = vunpack.c.h.b16 %v530
    %v727 = vunpack.c.l.b16 %v531
    %v728 = vunpack.c.h.b16 %v531
    %v729 = vunpack.c.l.b16 %v532
    %v730 = vunpack.c.h.b16 %v532
    %v731 = vunpack.c.l.b16 %v533
    %v732 = vunpack.c.h.b16 %v533
    %v733 = vunpack.c.l.b16 %v534
    %v734 = vunpack.c.h.b16 %v534
    %v735 = vunpack.c.l.b16 %v535
    %v736 = vunpack.c.h.b16 %v535
    %v737 = vunpack.c.l.b16 %v536
    %v738 = vunpack.c.h.b16 %v536
    %v739 = vunpack.c.l.b16 %v537
    %v740 = vunpack.c.h.b16 %v537
    %v741 = vunpack.c.l.b16 %v538
    %v742 = vunpack.c.h.b16 %v538
    %v743 = vpack.c.b16 %v617, %v615
    %v744 = vpack.c.b16 %v618, %v616
    %v745 = vpack.c.b16 %v621, %v619
    %v746 = vpack.c.b16 %v622, %v620
    %v747 = vpack.c.b16 %v625, %v623
    %v748 = vpack.c.b16 %v626, %v624
    %v749 = vpack.c.b16 %v629, %v627
    %v750 = vpack.c.b16 %v630, %v628
    %v751 = vpack.c.b16 %v633, %v631
    %v752 = vpack.c.b16 %v634, %v632
    %v753 = vpack.c.b16 %v637, %v635
    %v754 = vpack.c.b16 %v638, %v636
    %v755 = vpack.c.b16 %v641, %v639
    %v756 = vpack.c.b16 %v642, %v640
    %v757 = vpack.c.b16 %v645, %v643
    %v758 = vpack.c.b16 %v646, %v644
    %v759 = vpack.c.b16 %v649, %v647
    %v760 = vpack.c.b16 %v650, %v648
    %v761 = vpack.c.b16 %v653, %v651
    %v762 = vpack.c.b16 %v654, %v652
    %v763 = vpack.c.b16 %v657, %v655
    %v764 = vpack.c.b16 %v658, %v656
    %v765 = vpack.c.b16 %v661, %v659
    %v766 = vpack.c.b16 %v662, %v660
    %v767 = vpack.c.b16 %v665, %v663
    %v768 = vpack.c.b16 %v666, %v664
    %v769 = vpack.c.b16 %v669, %v667
    %v770 = vpack.c.b16 %v670, %v668
    %v771 = vpack.c.b16 %v673, %v671
    %v772 = vpack.c.b16 %v674, %v672
    %v773 = vpack.c.b16 %v677, %v675
    %v774 = vpack.c.b16 %v678, %v676
    %v775 = vpack.c.b16 %v681, %v679
    %v776 = vpack.c.b16 %v682, %v680
    %v777 = vpack.c.b16 %v685, %v683
    %v778 = vpack.c.b16 %v686, %v684
    %v779 = vpack.c.b16 %v689, %v687
    %v780 = vpack.c.b16 %v690, %v688
    %v781 = vpack.c.b16 %v693, %v691
    %v782 = vpack.c.b16 %v694, %v692
    %v783 = vpack.c.b16 %v697, %v695
    %v784 = vpack.c.b16 %v698, %v696
    %v785 = vpack.c.b16 %v701, %v699
    %v786 = vpack.c.b16 %v702, %v700
    %v787 = vpack.c.b16 %v705, %v703
    %v788 = vpack.c.b16 %v706, %v704
    %v789 = vpack.c.b16 %v709, %v707
    %v790 = vpack.c.b16 %v710, %v708
    %v791 = vpack.c.b16 %v713, %v711
    %v792 = vpack.c.b16 %v714, %v712
    %v793 = vpack.c.b16 %v717, %v715
    %v794 = vpack.c.b16 %v718, %v716
    %v795 = vpack.c.b16 %v721, %v719
    %v796 = vpack.c.b16 %v722, %v720
    %v797 = vpack.c.b16 %v725, %v723
    %v798 = vpack.c.b16 %v726, %v724
    %v799 = vpack.c.b16 %v729, %v727
    %v800 = vpack.c.b16 %v730, %v728
    %v801 = vpack.c.b16 %v733, %v731
    %v802 = vpack.c.b16 %v734, %v732
    %v803 = vpack.c.b16 %v737, %v735
    %v804 = vpack.c.b16 %v738, %v736
    %v805 = vpack.c.b16 %v741, %v739
    %v806 = vpack.c.b16 %v742, %v740
    %871 = vmatprep.subr.bf16.mxu0 %v744
    %872 = vmatpush1.bf16.msra.mxu0 %v743
    %873 = vmatprep.subr.bf16.mxu0 %v746
    %874 = vmatpush1.bf16.msra.mxu0 %v745
    %875 = vmatprep.subr.bf16.mxu0 %v748
    %876 = vmatpush1.bf16.msra.mxu0 %v747
    %877 = vmatprep.subr.bf16.mxu0 %v750
    %878 = vmatpush1.bf16.msra.mxu0 %v749
    %879 = vmatprep.subr.bf16.mxu0 %v752
    %880 = vmatpush1.bf16.msra.mxu0 %v751
    %881 = vmatprep.subr.bf16.mxu0 %v754
    %882 = vmatpush1.bf16.msra.mxu0 %v753
    %883 = vmatprep.subr.bf16.mxu0 %v756
    %884 = vmatpush1.bf16.msra.mxu0 %v755
    %885 = vmatprep.subr.bf16.mxu0 %v758
    %886 = vmatpush1.bf16.msra.mxu0 %v757
    %887 = vmatprep.subr.bf16.mxu0 %v760
    %888 = vmatpush1.bf16.msra.mxu0 %v759
    %889 = vmatprep.subr.bf16.mxu0 %v762
    %890 = vmatpush1.bf16.msra.mxu0 %v761
    %891 = vmatprep.subr.bf16.mxu0 %v764
    %892 = vmatpush1.bf16.msra.mxu0 %v763
    %893 = vmatprep.subr.bf16.mxu0 %v766
    %894 = vmatpush1.bf16.msra.mxu0 %v765
    %895 = vmatprep.subr.bf16.mxu0 %v768
    %896 = vmatpush1.bf16.msra.mxu0 %v767
    %897 = vmatprep.subr.bf16.mxu0 %v770
    %898 = vmatpush1.bf16.msra.mxu0 %v769
    %899 = vmatprep.subr.bf16.mxu0 %v772
    %900 = vmatpush1.bf16.msra.mxu0 %v771
    %901 = vmatprep.subr.bf16.mxu0 %v774
    %902 = vmatpush1.bf16.msra.mxu0 %v773
    %903 = vmatprep.mubr.bf16.mxu0 %v472
    %904 = vmatmul.mubr.bf16.gmra.mrb[0].mxu0 %v471
    %v905 = vpop.f32.mrb[0].mxu0
    %v906 = vadd.f32 %v544, %v905
    %v907 = vpop.f32.mrb[0].mxu0
    %v908 = vadd.f32 %v548, %v907
    %v909 = vpop.f32.mrb[0].mxu0
    %v910 = vpop.f32.mrb[0].mxu0
    %911 = vdwg.mxu0
    %912 = vmatprep.subr.bf16.mxu0 %v776
    %913 = vmatpush1.bf16.msra.mxu0 %v775
    %914 = vmatprep.subr.bf16.mxu0 %v778
    %915 = vmatpush1.bf16.msra.mxu0 %v777
    %916 = vmatprep.subr.bf16.mxu0 %v780
    %917 = vmatpush1.bf16.msra.mxu0 %v779
    %918 = vmatprep.subr.bf16.mxu0 %v782
    %919 = vmatpush1.bf16.msra.mxu0 %v781
    %920 = vmatprep.subr.bf16.mxu0 %v784
    %921 = vmatpush1.bf16.msra.mxu0 %v783
    %922 = vmatprep.subr.bf16.mxu0 %v786
    %923 = vmatpush1.bf16.msra.mxu0 %v785
    %924 = vmatprep.subr.bf16.mxu0 %v788
    %925 = vmatpush1.bf16.msra.mxu0 %v787
    %926 = vmatprep.subr.bf16.mxu0 %v790
    %927 = vmatpush1.bf16.msra.mxu0 %v789
    %928 = vmatprep.subr.bf16.mxu0 %v792
    %929 = vmatpush1.bf16.msra.mxu0 %v791
    %930 = vmatprep.subr.bf16.mxu0 %v794
    %931 = vmatpush1.bf16.msra.mxu0 %v793
    %932 = vmatprep.subr.bf16.mxu0 %v796
    %933 = vmatpush1.bf16.msra.mxu0 %v795
    %934 = vmatprep.subr.bf16.mxu0 %v798
    %935 = vmatpush1.bf16.msra.mxu0 %v797
    %936 = vmatprep.subr.bf16.mxu0 %v800
    %937 = vmatpush1.bf16.msra.mxu0 %v799
    %938 = vmatprep.subr.bf16.mxu0 %v802
    %939 = vmatpush1.bf16.msra.mxu0 %v801
    %940 = vmatprep.subr.bf16.mxu0 %v804
    %941 = vmatpush1.bf16.msra.mxu0 %v803
    %942 = vmatprep.subr.bf16.mxu0 %v806
    %943 = vmatpush1.bf16.msra.mxu0 %v805
    %944 = vmatprep.mubr.bf16.mxu0 %v474
    %945 = vmatmul.mubr.bf16.gmra.mrb[0].mxu0 %v473
    %v946 = vpop.f32.mrb[0].mxu0
    %v947 = vadd.f32 %v906, %v946
    %v948 = vpop.f32.mrb[0].mxu0
    %v949 = vadd.f32 %v908, %v948
    %v950 = vpop.f32.mrb[0].mxu0
    %v951 = vpop.f32.mrb[0].mxu0
    %952 = vdwg.mxu0
    %v953 = vmax.f32 %v947, 0.0
    %v954 = vmax.f32 %v949, 0.0
    %v955 = vld [vmem:[%s7] sm:$0x3]
    %v957 = vlaneseq
    %v958 = vshrl.u32 %v957, 7
    %v959 = vsub.s32 0, %v958
    %v960 = vrot.slane %v955, %v959
    %v961 = vlaneseq
    %v962 = vshrl.u32 %v961, 7
    %v963 = vsub.s32 1, %v962
    %v964 = vrot.slane %v955, %v963
    %v967 = vmul.f32 %v953, %v960
    %v968 = vmul.f32 %v954, %v964
    %v969 = vadd.f32 %v967, %v968
    %970 = vadd.xlane.f32.xlu0 %v969
    %v971 = vpop.xlane.xlu0 %970
    %v972 = vld [vmem:[#allocation2] sm:$0x1]
    %v974 = vlaneseq
    %v975 = vshrl.u32 %v974, 7
    %v976 = vsub.s32 0, %v975
    %v977 = vrot.slane %v972, %v976
    %v979 = vadd.f32 %v971, %v977
    %v980 = vxor.u32 %v979, 2147483648
    %v981 = vmul.f32 %v980, 1.442695
    %v982 = vpow.pop %v981
    %v983 = vadd.f32 %v982, 1.0
    %v984 = vrcp.pop %v983
    %v985 = vmul.f32 1.0, %v984
    %vm986 = vcmask 7168
    %987 = vst.msk [vmem:[%s9] sm:$0xff] %vm986, %v985
    // Predicated region
    $region50: #{playlist_recommender_forward.1} parent=1 // pred_check
      _
    $region51: #{playlist_recommender_forward.1} parent=1 // pred_check_branch
      %989 = sbr.rel (0) target = $region53
    $region52: #{playlist_recommender_forward.1} parent=1 // pred_region
      _
    $region53: #{playlist_recommender_forward.1} parent=1 // pred_fallthru
      _
    // Predicated region
    $region54: #{playlist_recommender_forward.1} parent=1 // pred_check
      _
    $region55: #{playlist_recommender_forward.1} parent=1 // pred_check_branch
      %991 = sbr.rel (0) target = $region57
    $region56: #{playlist_recommender_forward.1} parent=1 // pred_region
      _
    $region57: #{playlist_recommender_forward.1} parent=1 // pred_fallthru
      _
    %992 = vsyncpa [#allocation4], 1
    %993 = vsyncpa [#allocation6], 1

</llo_original>
